<compile_context>
chip_gen: v5e
topology: v5e:2x2
jax: 0.10.0
libtpu: 0.0.40
codegen_flags: <defaults>
</compile_context>

<pallas_src>
import jax
import jax.numpy as jnp
from jax.experimental import pallas as pl
from jax.experimental.pallas import tpu as pltpu


# ----------------------------------------------------------------------------
# Plain-JAX glue: farthest point sampling, ball query, grouping.
# TODO(synk): FPS / ball-query involve data-dependent argmax/sort/gather with no clean
# rectangular-tile Pallas equivalent at these sizes; they stay in plain JAX.
# ----------------------------------------------------------------------------
def square_distance(src, dst):
    # src [B,N,C], dst [B,M,C] -> [B,N,M]
    d = -2.0 * jnp.einsum("bnc,bmc->bnm", src, dst)
    d = d + jnp.sum(src ** 2, -1)[:, :, None]
    d = d + jnp.sum(dst ** 2, -1)[:, None, :]
    return d


def index_points(points, idx):
    # points [B,N,C], idx [B,S] or [B,S,K] -> [B,S,C] or [B,S,K,C]
    return jax.vmap(lambda p, i: p[i])(points, idx)


def farthest_point_sample(xyz, npoint, key):
    # lax.fori_loop instead of a Python loop so trace/compile time stays O(1) in npoint.
    B, N, _ = xyz.shape
    batch_idx = jnp.arange(B)
    distance0 = jnp.full((B, N), 1e10, dtype=xyz.dtype)
    farthest0 = jax.random.randint(key, (B,), 0, N, dtype=jnp.int32)
    centroids0 = jnp.zeros((B, npoint), dtype=jnp.int32)

    def body(i, carry):
        centroids, distance, farthest = carry
        centroids = centroids.at[:, i].set(farthest)
        centroid = xyz[batch_idx, farthest, :][:, None, :]          # [B,1,3]
        dist = jnp.sum((xyz - centroid) ** 2, -1)                   # [B,N]
        distance = jnp.minimum(distance, dist)
        farthest = jnp.argmax(distance, -1).astype(jnp.int32)
        return centroids, distance, farthest

    centroids, _, _ = jax.lax.fori_loop(
        0, npoint, body, (centroids0, distance0, farthest0))
    return centroids                                                # [B,npoint]


def query_ball_point(radius, nsample, xyz, new_xyz):
    B, N, _ = xyz.shape
    S = new_xyz.shape[1]
    group_idx = jnp.broadcast_to(jnp.arange(N, dtype=jnp.int32), (B, S, N))
    sqrdists = square_distance(new_xyz, xyz)
    group_idx = jnp.where(sqrdists > radius ** 2, N, group_idx)
    group_idx = jnp.sort(group_idx, axis=-1)[:, :, :nsample]
    group_first = jnp.broadcast_to(group_idx[:, :, :1], group_idx.shape)
    group_idx = jnp.where(group_idx == N, group_first, group_idx)
    return group_idx


def sample_and_group(npoint, radius, nsample, xyz, points, key):
    B, N, C = xyz.shape
    fps_idx = farthest_point_sample(xyz, npoint, key)               # [B,S]
    new_xyz = index_points(xyz, fps_idx)                            # [B,S,3]
    idx = query_ball_point(radius, nsample, xyz, new_xyz)           # [B,S,K]
    grouped_xyz = index_points(xyz, idx)                            # [B,S,K,3]
    grouped_xyz_norm = grouped_xyz - new_xyz[:, :, None, :]
    if points is not None:
        grouped_points = index_points(points, idx)                  # [B,S,K,D]
        new_points = jnp.concatenate([grouped_xyz_norm, grouped_points], axis=-1)
    else:
        new_points = grouped_xyz_norm
    return new_xyz, new_points


def sample_and_group_all(xyz, points):
    B, N, C = xyz.shape
    new_xyz = jnp.zeros((B, 1, C), dtype=xyz.dtype)
    grouped_xyz = xyz[:, None, :, :]
    if points is not None:
        new_points = jnp.concatenate([grouped_xyz, points[:, None, :, :]], axis=-1)
    else:
        new_points = grouped_xyz
    return new_xyz, new_points


# ----------------------------------------------------------------------------
# Pallas kernel: per-(batch, S-tile) MLP (channel matmul, bf16 in / f32 acc) + shift + ReLU,
# then VPU max-accumulation over the K slabs.
# ----------------------------------------------------------------------------
def _round_up(x, m):
    return ((x + m - 1) // m) * m


def _choose_s_tile(S, K, target_rows=2048):
    """Largest divisor of S that is a multiple of 8 and keeps K*tS <= target_rows."""
    if S % 8 != 0:
        return S                       # block dim must equal full dim if not 8-aligned
    cap = max(8, target_rows // max(K, 1))
    best = None
    for ts in range(8, S + 1, 8):
        if S % ts == 0 and ts <= cap:
            best = ts
    return best if best is not None else S


def _make_sa_mlp_kernel(num_layers, K, tS):
    def kernel(x_ref, *rest):
        out_ref = rest[-1]
        p = rest[:-1]
        c_in = x_ref.shape[-1]
        # (K, tS, C_in_pad) bf16 -> flatten K into sublanes (tS is a multiple of 8 or == S)
        h = x_ref[0].reshape(K * tS, c_in)
        for li in range(num_layers):
            w = p[2 * li][...]                                       # bf16 (C_i_pad, C_o_pad)
            shift = p[2 * li + 1][...]                               # f32  (1, C_o_pad)
            acc = jnp.dot(h, w, preferred_element_type=jnp.float32)  # MXU, f32 accumulate
            acc = jnp.maximum(acc + shift, 0.0)                      # folded-BN shift + ReLU
            h = acc.astype(jnp.bfloat16) if li + 1 < num_layers else acc
        # Max-pool over K as an accumulating elementwise maximum over contiguous
        # (tS, C_out) slabs -> stays on the VPU, no XLU cross-sublane reduce.
        m = h[0:tS, :]
        for k in range(1, K):
            m = jnp.maximum(m, h[k * tS:(k + 1) * tS, :])
        out_ref[0] = m                                               # (tS, C_last_pad) f32
    return kernel


def sa_mlp_maxpool(new_points, weights_folded, shifts):
    """new_points [B, S, K, C_in] -> [B, S, C_last] via Pallas kernel."""
    B, S, K, C_in = new_points.shape
    C_in_pad = _round_up(C_in, 128)

    # [B, K, S, C_in_pad], bf16 (halves DMA bytes; lane axis = padded channels).
    x = jnp.transpose(new_points, (0, 2, 1, 3))
    x = jnp.pad(x, ((0, 0), (0, 0), (0, 0), (0, C_in_pad - C_in)))
    x = x.astype(jnp.bfloat16)

    tS = _choose_s_tile(S, K)
    grid = (B, S // tS)

    in_specs = [pl.BlockSpec((1, K, tS, C_in_pad), lambda b, s: (b, 0, s, 0))]
    args = [x]
    c_prev = C_in_pad
    for w, sh in zip(weights_folded, shifts):
        ci, co = w.shape
        co_pad = _round_up(co, 128)
        # Zero-pad rows/cols of the (BN-folded) weight; zero-pad shift so padded output
        # channels stay exactly 0 after ReLU (and contribute 0 to the next layer).
        wp = jnp.zeros((c_prev, co_pad), jnp.float32).at[:ci, :co].set(w)
        shp = jnp.zeros((1, co_pad), jnp.float32).at[0, :co].set(sh)
        in_specs.append(pl.BlockSpec((c_prev, co_pad), lambda b, s: (0, 0)))
        in_specs.append(pl.BlockSpec((1, co_pad), lambda b, s: (0, 0)))
        args.extend([wp.astype(jnp.bfloat16), shp])
        c_prev = co_pad
    C_last = weights_folded[-1].shape[1]
    C_last_pad = c_prev

    kernel = _make_sa_mlp_kernel(len(weights_folded), K, tS)
    out = pl.pallas_call(
        kernel,
        out_shape=jax.ShapeDtypeStruct((B, S, C_last_pad), jnp.float32),
        grid=grid,
        in_specs=in_specs,
        out_specs=pl.BlockSpec((1, tS, C_last_pad), lambda b, s: (b, s, 0)),
        compiler_params=pltpu.CompilerParams(
            dimension_semantics=("parallel", "parallel"),
            vmem_limit_bytes=32 * 1024 * 1024),
    )(*args)
    return out[:, :, :C_last]


# ----------------------------------------------------------------------------
# PointNetSetAbstraction (forward only) in JAX + Pallas
# ----------------------------------------------------------------------------
class PointNetSetAbstraction:
    def __init__(self, npoint, radius, nsample, in_channel, mlp, group_all, key):
        self.npoint = npoint
        self.radius = radius
        self.nsample = nsample
        self.group_all = group_all

        # Deterministic parameter init (Conv2d 1x1 weights/biases + BatchNorm2d in eval mode:
        # running_mean=0, running_var=1, gamma=1, beta=0). BN scale is folded into the conv
        # weight; the remaining per-channel shift is applied in the kernel.
        eps = 1e-5
        self.weights, self.shifts = [], []
        last_channel = in_channel
        for i, out_channel in enumerate(mlp):
            kw, kb = jax.random.split(jax.random.fold_in(key, i))
            w = 0.1 * jax.random.normal(kw, (last_channel, out_channel), jnp.float32)
            b = 0.1 * jax.random.normal(kb, (out_channel,), jnp.float32)
            gamma = jnp.ones((out_channel,), jnp.float32)
            beta = jnp.zeros((out_channel,), jnp.float32)
            rmean = jnp.zeros((out_channel,), jnp.float32)
            rvar = jnp.ones((out_channel,), jnp.float32)
            bn_scale = gamma / jnp.sqrt(rvar + eps)
            self.weights.append(w * bn_scale[None, :])               # fold BN scale into weight
            self.shifts.append(beta + (b - rmean) * bn_scale)
            last_channel = out_channel

    def _group(self, xyz, points, fps_key):
        xyz_t = jnp.transpose(xyz, (0, 2, 1))                        # [B,N,3]
        points_t = None if points is None else jnp.transpose(points, (0, 2, 1))
        if self.group_all:
            return sample_and_group_all(xyz_t, points_t)
        return sample_and_group(self.npoint, self.radius, self.nsample,
                                xyz_t, points_t, fps_key)

    def __call__(self, xyz, points, fps_key):
        """
        xyz:    [B, 3, N]   (channel-first, like PyTorch)
        points: [B, D, N] or None
        returns new_xyz [B, 3, S], new_points [B, C_last, S]
        """
        new_xyz, new_points = self._group(xyz, points, fps_key)      # [B,S,3], [B,S,K,C_in]
        feat = sa_mlp_maxpool(new_points, self.weights, self.shifts)  # [B,S,C_last]
        return jnp.transpose(new_xyz, (0, 2, 1)), jnp.transpose(feat, (0, 2, 1))

    def reference(self, xyz, points, fps_key):
        """Pure-JAX f32 reference forward (same grouping, un-padded MLP + max-pool)."""
        new_xyz, new_points = self._group(xyz, points, fps_key)
        h = new_points
        for w, sh in zip(self.weights, self.shifts):
            h = jnp.maximum(jnp.einsum("bskc,cd->bskd", h, w) + sh, 0.0)
        feat = jnp.max(h, axis=2)
        return jnp.transpose(new_xyz, (0, 2, 1)), jnp.transpose(feat, (0, 2, 1))


if __name__ == "__main__":
    key = jax.random.PRNGKey(0)
    k_xyz, k_pts, k_param, k_fps = jax.random.split(key, 4)

    B, N, D = 2, 16, 4          # batch, points, feature channels
    npoint, radius, nsample = 8, 0.4, 8
    mlp = [16, 32]
    in_channel = D + 3

    xyz = jax.random.uniform(k_xyz, (B, 3, N), jnp.float32)          # [B, 3, N]
    points = jax.random.normal(k_pts, (B, D, N), jnp.float32)        # [B, D, N]

    sa = PointNetSetAbstraction(npoint, radius, nsample, in_channel, mlp,
                                group_all=False, key=k_param)
    new_xyz, new_points = sa(xyz, points, k_fps)
    jax.block_until_ready((new_xyz, new_points))

    assert new_xyz.shape == (B, 3, npoint)
    assert new_points.shape == (B, mlp[-1], npoint)

    # Numerical sanity check against the pure-JAX f32 reference (bf16 matmul tolerance).
    ref_xyz, ref_points = sa.reference(xyz, points, k_fps)
    jax.block_until_ready((ref_xyz, ref_points))
    assert float(jnp.max(jnp.abs(new_xyz - ref_xyz))) < 1e-5
    assert float(jnp.max(jnp.abs(new_points - ref_points))) < 5e-2

    print("KERNEL_OK")
</pallas_src>

<mosaic_0001>
module attributes {stable_mosaic.version = 11 : i64} {
  func.func @kernel(%arg0: i32, %arg1: i32, %arg2: memref<1x8x8x128xbf16, #tpu.memory_space<vmem>>, %arg3: memref<128x128xbf16, #tpu.memory_space<vmem>>, %arg4: memref<1x128xf32, #tpu.memory_space<vmem>>, %arg5: memref<128x128xbf16, #tpu.memory_space<vmem>>, %arg6: memref<1x128xf32, #tpu.memory_space<vmem>>, %arg7: memref<1x8x128xf32, #tpu.memory_space<vmem>>) attributes {dimension_semantics = [#tpu.dimension_semantics<parallel>, #tpu.dimension_semantics<parallel>], iteration_bounds = array<i64: 2, 1>, scalar_prefetch = 0 : i64, scratch_operands = 0 : i64, tpu.core_type = #tpu.core_type<tc>, window_params = [{transform_indices = @transform_0, window_bounds = array<i64: 1, 8, 8, 128>}, {pipeline_mode = #tpu.pipeline_mode<synchronous>, transform_indices = @transform_1, window_bounds = array<i64: 128, 128>}, {pipeline_mode = #tpu.pipeline_mode<synchronous>, transform_indices = @transform_2, window_bounds = array<i64: 1, 128>}, {pipeline_mode = #tpu.pipeline_mode<synchronous>, transform_indices = @transform_3, window_bounds = array<i64: 128, 128>}, {pipeline_mode = #tpu.pipeline_mode<synchronous>, transform_indices = @transform_4, window_bounds = array<i64: 1, 128>}, {transform_indices = @transform_5, window_bounds = array<i64: 1, 8, 128>}]} {
    %c0 = arith.constant 0 : index
    %c0_0 = arith.constant 0 : index
    %c0_1 = arith.constant 0 : index
    %c0_2 = arith.constant 0 : index
    %0 = vector.load %arg2[%c0, %c0_0, %c0_1, %c0_2] : memref<1x8x8x128xbf16, #tpu.memory_space<vmem>>, vector<1x8x8x128xbf16>
    %1 = vector.shape_cast %0 : vector<1x8x8x128xbf16> to vector<8x8x128xbf16>
    %2 = vector.shape_cast %1 : vector<8x8x128xbf16> to vector<64x128xbf16>
    %c0_3 = arith.constant 0 : index
    %c0_4 = arith.constant 0 : index
    %3 = vector.load %arg3[%c0_3, %c0_4] : memref<128x128xbf16, #tpu.memory_space<vmem>>, vector<128x128xbf16>
    %c0_5 = arith.constant 0 : index
    %c0_6 = arith.constant 0 : index
    %4 = vector.load %arg4[%c0_5, %c0_6] : memref<1x128xf32, #tpu.memory_space<vmem>>, vector<1x128xf32>
    %cst = arith.constant dense<0.000000e+00> : vector<64x128xf32>
    %5 = tpu.matmul %2, %3, %cst {dimension_numbers = #tpu.dot_dimension_numbers<[1], [0], [0], [1], [0, 0, 1, 1], [], []>} : vector<64x128xbf16>, vector<128x128xbf16>, vector<64x128xf32> -> vector<64x128xf32>
    %6 = vector.broadcast %4 : vector<1x128xf32> to vector<64x128xf32>
    %7 = arith.addf %5, %6 : vector<64x128xf32>
    %cst_7 = arith.constant 0.000000e+00 : f32
    %8 = vector.broadcast %cst_7 : f32 to vector<64x128xf32>
    %9 = arith.maximumf %7, %8 : vector<64x128xf32>
    %10 = arith.truncf %9 : vector<64x128xf32> to vector<64x128xbf16>
    %c0_8 = arith.constant 0 : index
    %c0_9 = arith.constant 0 : index
    %11 = vector.load %arg5[%c0_8, %c0_9] : memref<128x128xbf16, #tpu.memory_space<vmem>>, vector<128x128xbf16>
    %c0_10 = arith.constant 0 : index
    %c0_11 = arith.constant 0 : index
    %12 = vector.load %arg6[%c0_10, %c0_11] : memref<1x128xf32, #tpu.memory_space<vmem>>, vector<1x128xf32>
    %cst_12 = arith.constant dense<0.000000e+00> : vector<64x128xf32>
    %13 = tpu.matmul %10, %11, %cst_12 {dimension_numbers = #tpu.dot_dimension_numbers<[1], [0], [0], [1], [0, 0, 1, 1], [], []>} : vector<64x128xbf16>, vector<128x128xbf16>, vector<64x128xf32> -> vector<64x128xf32>
    %14 = vector.broadcast %12 : vector<1x128xf32> to vector<64x128xf32>
    %15 = arith.addf %13, %14 : vector<64x128xf32>
    %cst_13 = arith.constant 0.000000e+00 : f32
    %16 = vector.broadcast %cst_13 : f32 to vector<64x128xf32>
    %17 = arith.maximumf %15, %16 : vector<64x128xf32>
    %18 = vector.extract_strided_slice %17 {offsets = [0, 0], sizes = [8, 128], strides = [1, 1]} : vector<64x128xf32> to vector<8x128xf32>
    %19 = vector.extract_strided_slice %17 {offsets = [8, 0], sizes = [8, 128], strides = [1, 1]} : vector<64x128xf32> to vector<8x128xf32>
    %20 = arith.maximumf %18, %19 : vector<8x128xf32>
    %21 = vector.extract_strided_slice %17 {offsets = [16, 0], sizes = [8, 128], strides = [1, 1]} : vector<64x128xf32> to vector<8x128xf32>
    %22 = arith.maximumf %20, %21 : vector<8x128xf32>
    %23 = vector.extract_strided_slice %17 {offsets = [24, 0], sizes = [8, 128], strides = [1, 1]} : vector<64x128xf32> to vector<8x128xf32>
    %24 = arith.maximumf %22, %23 : vector<8x128xf32>
    %25 = vector.extract_strided_slice %17 {offsets = [32, 0], sizes = [8, 128], strides = [1, 1]} : vector<64x128xf32> to vector<8x128xf32>
    %26 = arith.maximumf %24, %25 : vector<8x128xf32>
    %27 = vector.extract_strided_slice %17 {offsets = [40, 0], sizes = [8, 128], strides = [1, 1]} : vector<64x128xf32> to vector<8x128xf32>
    %28 = arith.maximumf %26, %27 : vector<8x128xf32>
    %29 = vector.extract_strided_slice %17 {offsets = [48, 0], sizes = [8, 128], strides = [1, 1]} : vector<64x128xf32> to vector<8x128xf32>
    %30 = arith.maximumf %28, %29 : vector<8x128xf32>
    %31 = vector.extract_strided_slice %17 {offsets = [56, 0], sizes = [8, 128], strides = [1, 1]} : vector<64x128xf32> to vector<8x128xf32>
    %32 = arith.maximumf %30, %31 : vector<8x128xf32>
    %c0_14 = arith.constant 0 : index
    %c0_15 = arith.constant 0 : index
    %c0_16 = arith.constant 0 : index
    %33 = vector.load %arg7[%c0_14, %c0_15, %c0_16] : memref<1x8x128xf32, #tpu.memory_space<vmem>>, vector<1x8x128xf32>
    %34 = vector.shape_cast %33 : vector<1x8x128xf32> to vector<8x128xf32>
    %35 = vector.shape_cast %32 : vector<8x128xf32> to vector<1x8x128xf32>
    tpu.vector_store %arg7[%c0_14, %c0_15, %c0_16], %35 {strides = array<i32>} : memref<1x8x128xf32, #tpu.memory_space<vmem>>, vector<1x8x128xf32>,
    return
  }
  func.func @transform_0(%arg0: i32, %arg1: i32) -> (i32, i32, i32, i32) {
    %c0_i32 = arith.constant 0 : i32
    %c0_i32_0 = arith.constant 0 : i32
    %c0_i32_1 = arith.constant 0 : i32
    return %arg0, %c0_i32, %arg1, %c0_i32_0 : i32, i32, i32, i32
  }
  func.func @transform_1(%arg0: i32, %arg1: i32) -> (i32, i32) {
    %c0_i32 = arith.constant 0 : i32
    %c0_i32_0 = arith.constant 0 : i32
    %c0_i32_1 = arith.constant 0 : i32
    return %c0_i32, %c0_i32_0 : i32, i32
  }
  func.func @transform_2(%arg0: i32, %arg1: i32) -> (i32, i32) {
    %c0_i32 = arith.constant 0 : i32
    %c0_i32_0 = arith.constant 0 : i32
    %c0_i32_1 = arith.constant 0 : i32
    return %c0_i32, %c0_i32_0 : i32, i32
  }
  func.func @transform_3(%arg0: i32, %arg1: i32) -> (i32, i32) {
    %c0_i32 = arith.constant 0 : i32
    %c0_i32_0 = arith.constant 0 : i32
    %c0_i32_1 = arith.constant 0 : i32
    return %c0_i32, %c0_i32_0 : i32, i32
  }
  func.func @transform_4(%arg0: i32, %arg1: i32) -> (i32, i32) {
    %c0_i32 = arith.constant 0 : i32
    %c0_i32_0 = arith.constant 0 : i32
    %c0_i32_1 = arith.constant 0 : i32
    return %c0_i32, %c0_i32_0 : i32, i32
  }
  func.func @transform_5(%arg0: i32, %arg1: i32) -> (i32, i32, i32) {
    %c0_i32 = arith.constant 0 : i32
    %c0_i32_0 = arith.constant 0 : i32
    return %arg0, %arg1, %c0_i32 : i32, i32, i32
  }
}

</mosaic_0001>

<llo_original>
// kernel: tpu_custom_call.1
$region0: #{tpu_custom_call.1}
  #allocation0 [shape = 'u32[]', space=smem, size = 0x4, offset = 0x4, fixed_abs, tag = 'smem constant byte address 0x4 - core index']
  #allocation1 [shape = 'u32[72,128]{1,0:T(1,128)}', space=vmem, size = 0x9000, scoped, tag = 'internal scratch']
  %s0 = inlined_call_operand.hbm [shape: bf16[2,8,8,128], index: 0, kind: input, shape index: {}]
  %s1 = inlined_call_operand.hbm [shape: bf16[128,128], index: 1, kind: input, shape index: {}]
  %s2 = inlined_call_operand.vmem [shape: f32[1,128], index: 2, kind: input, shape index: {}]
  %s3 = inlined_call_operand.hbm [shape: bf16[128,128], index: 3, kind: input, shape index: {}]
  %s4 = inlined_call_operand.vmem [shape: f32[1,128], index: 4, kind: input, shape index: {}]
  %s5 = inlined_call_operand.hbm [shape: f32[2,8,128], index: 5, kind: output, shape index: {}]
  %s6 = sld [smem:[#allocation0]]
  $region65: #{tpu_custom_call.1} parent=0
    _
  %s8 = ssub.s32 1, %s6
  %s9 = scalar_select 0, %s8, %s6
  $region1: #{tpu_custom_call.1} parent=0
    #allocation2 [shape = 'u8[32768]{0}', space=vmem, size = 0x8000, scoped, tag = 'input window, operand 0']
    #allocation3 [shape = 's32[2]{0}', space=sflag, size = 0x8, scoped, tag = 'scoped memory for tpu_custom_call.1']
    #allocation4 [shape = 's32[2]{0}', space=sflag, size = 0x8, scoped, tag = 'scoped memory for tpu_custom_call.1']
    #allocation5 [shape = 'u8[32768]{0}', space=vmem, size = 0x8000, scoped, tag = 'input window, operand 1, single buffered']
    #allocation6 [shape = 's32[1]{0}', space=sflag, size = 0x4, scoped, tag = 'scoped memory for tpu_custom_call.1']
    #allocation7 [shape = 'u8[32768]{0}', space=vmem, size = 0x8000, scoped, tag = 'input window, operand 3, single buffered']
    #allocation8 [shape = 'u8[8192]{0}', space=vmem, size = 0x2000, scoped, tag = 'output window, operand 0']
    %10 = vsyncpa [#allocation3], 0
    %s11 = scalar_lea.sflag [#allocation3], 1
    %12 = vsyncpa %s11, 0
    %13 = vsyncpa [#allocation6], 0
    %14 = vsyncpa [#allocation4], 0
    %s15 = scalar_lea.sflag [#allocation4], 1
    %16 = vsyncpa %s15, 0
    loop: start=0, step=1, limit=4
    $region2: #{tpu_custom_call.1} parent=1 // loop_pre_header
      _
    $region3: #{tpu_custom_call.1} parent=1 // loop_header
      %s18 = sphi 0, %s22
      %p19 = scmp.ge.s32.totalorder %s18, 4
      %s25 = sphi 0, %s37
      %s26 = sphi 0, %s33
      %s27 = sphi 0, %s25
      %s28 = sphi 0, %s26
      %s29 = sphi 0, %s27
      %s30 = sphi 0, %s28
      %s42 = sphi 0, %s44
      %s45 = sphi 0, %s42
      %s46 = sphi 0, %s45
      %s62 = sphi 0, %s46
      %s66 = sphi 0, %s66
      %s68 = sphi 0, %s66
      %s69 = sphi 0, %s68
      %s83 = sphi 0, %s69
      %s87 = sphi 0, %s87
      %s89 = sphi 0, %s87
      %s90 = sphi 0, %s89
      %s104 = sphi 0, %s90
      %s108 = sphi 0, %s108
      %s110 = sphi 0, %s108
      %s111 = sphi 0, %s110
      %s125 = sphi 0, %s111
      %s129 = sphi 0, %s129
      %s131 = sphi 0, %s129
      %s132 = sphi 0, %s131
      %s146 = sphi 0, %s132
      %s154 = sphi 0, %s156
      %s157 = sphi 0, %s154
      %s158 = sphi 0, %s157
      %s174 = sphi 0, %s158
    $region4: #{tpu_custom_call.1} parent=1 // loop_header_branch
      %21 = sbr.rel (%p19) target = $region8
    $region5: #{tpu_custom_call.1} parent=1 // loop_body
      %s23 = ssub.s32 %s18, 1
      %s24 = ssub.s32 %s18, 2
      %s31 = sadd.s32 1, %s26
      %p32 = scmp.ge.s32.totalorder %s31, 1
      %s33 = scalar_select %p32, 0, %s31
      %s34 = sadd.s32 1, %s25
      %s35 = scalar_select %p32, %s34, %s25
      %p36 = scmp.ge.s32.totalorder %s35, 2
      %s37 = scalar_select %p36, 0, %s35
      %s38 = ssub.s32 %s25, %s37
      %s39 = ssub.s32 %s26, %s33
      %s40 = sor.u32 %s38, %s39
      %p41 = scmp.eq.s32.totalorder %s40, 0
      %s43 = sadd.s32 %s42, 1
      %s44 = scalar_select %p41, %s42, %s43
      %p47 = pneg %p41
      %p48 = scmp.eq.s32.totalorder %s18, 1
      %p49 = por %p47, %p48
      %p50 = scmp.ne.s32.totalorder %s42, %s45
      %p51 = scmp.eq.s32.totalorder %s18, 0
      %p52 = por %p50, %p51
      %p53 = scmp.ne.s32.totalorder %s42, %s45
      %p54 = scmp.eq.s32.totalorder %s23, 1
      %p55 = por %p53, %p54
      %p56 = scmp.ne.s32.totalorder %s45, %s46
      %p57 = scmp.eq.s32.totalorder %s23, 0
      %p58 = por %p56, %p57
      %p59 = scmp.ne.s32.totalorder %s45, %s46
      %p60 = scmp.eq.s32.totalorder %s24, 1
      %p61 = por %p59, %p60
      %p63 = scmp.ne.s32.totalorder %s46, %s62
      %p64 = scmp.eq.s32.totalorder %s24, 0
      %p65 = por %p63, %p64
      %s67 = sadd.s32 %s66, 1
      %p70 = scmp.eq.s32.totalorder %s18, 1
      %p71 = scmp.ne.s32.totalorder %s66, %s68
      %p72 = scmp.eq.s32.totalorder %s18, 0
      %p73 = por %p71, %p72
      %p74 = scmp.ne.s32.totalorder %s66, %s68
      %p75 = scmp.eq.s32.totalorder %s23, 1
      %p76 = por %p74, %p75
      %p77 = scmp.ne.s32.totalorder %s68, %s69
      %p78 = scmp.eq.s32.totalorder %s23, 0
      %p79 = por %p77, %p78
      %p80 = scmp.ne.s32.totalorder %s68, %s69
      %p81 = scmp.eq.s32.totalorder %s24, 1
      %p82 = por %p80, %p81
      %p84 = scmp.ne.s32.totalorder %s69, %s83
      %p85 = scmp.eq.s32.totalorder %s24, 0
      %p86 = por %p84, %p85
      %s88 = sadd.s32 %s87, 1
      %p91 = scmp.eq.s32.totalorder %s18, 1
      %p92 = scmp.ne.s32.totalorder %s87, %s89
      %p93 = scmp.eq.s32.totalorder %s18, 0
      %p94 = por %p92, %p93
      %p95 = scmp.ne.s32.totalorder %s87, %s89
      %p96 = scmp.eq.s32.totalorder %s23, 1
      %p97 = por %p95, %p96
      %p98 = scmp.ne.s32.totalorder %s89, %s90
      %p99 = scmp.eq.s32.totalorder %s23, 0
      %p100 = por %p98, %p99
      %p101 = scmp.ne.s32.totalorder %s89, %s90
      %p102 = scmp.eq.s32.totalorder %s24, 1
      %p103 = por %p101, %p102
      %p105 = scmp.ne.s32.totalorder %s90, %s104
      %p106 = scmp.eq.s32.totalorder %s24, 0
      %p107 = por %p105, %p106
      %s109 = sadd.s32 %s108, 1
      %p112 = scmp.eq.s32.totalorder %s18, 1
      %p113 = scmp.ne.s32.totalorder %s108, %s110
      %p114 = scmp.eq.s32.totalorder %s18, 0
      %p115 = por %p113, %p114
      %p116 = scmp.ne.s32.totalorder %s108, %s110
      %p117 = scmp.eq.s32.totalorder %s23, 1
      %p118 = por %p116, %p117
      %p119 = scmp.ne.s32.totalorder %s110, %s111
      %p120 = scmp.eq.s32.totalorder %s23, 0
      %p121 = por %p119, %p120
      %p122 = scmp.ne.s32.totalorder %s110, %s111
      %p123 = scmp.eq.s32.totalorder %s24, 1
      %p124 = por %p122, %p123
      %p126 = scmp.ne.s32.totalorder %s111, %s125
      %p127 = scmp.eq.s32.totalorder %s24, 0
      %p128 = por %p126, %p127
      %s130 = sadd.s32 %s129, 1
      %p133 = scmp.eq.s32.totalorder %s18, 1
      %p134 = scmp.ne.s32.totalorder %s129, %s131
      %p135 = scmp.eq.s32.totalorder %s18, 0
      %p136 = por %p134, %p135
      %p137 = scmp.ne.s32.totalorder %s129, %s131
      %p138 = scmp.eq.s32.totalorder %s23, 1
      %p139 = por %p137, %p138
      %p140 = scmp.ne.s32.totalorder %s131, %s132
      %p141 = scmp.eq.s32.totalorder %s23, 0
      %p142 = por %p140, %p141
      %p143 = scmp.ne.s32.totalorder %s131, %s132
      %p144 = scmp.eq.s32.totalorder %s24, 1
      %p145 = por %p143, %p144
      %p147 = scmp.ne.s32.totalorder %s132, %s146
      %p148 = scmp.eq.s32.totalorder %s24, 0
      %p149 = por %p147, %p148
      %s150 = ssub.s32 %s25, %s37
      %s151 = ssub.s32 %s26, %s33
      %s152 = sor.u32 %s150, %s151
      %p153 = scmp.eq.s32.totalorder %s152, 0
      %s155 = sadd.s32 %s154, 1
      %s156 = scalar_select %p153, %s154, %s155
      %p159 = pneg %p153
      %p160 = scmp.eq.s32.totalorder %s18, 1
      %p161 = por %p159, %p160
      %p162 = scmp.ne.s32.totalorder %s154, %s157
      %p163 = scmp.eq.s32.totalorder %s18, 0
      %p164 = por %p162, %p163
      %p165 = scmp.ne.s32.totalorder %s154, %s157
      %p166 = scmp.eq.s32.totalorder %s23, 1
      %p167 = por %p165, %p166
      %p168 = scmp.ne.s32.totalorder %s157, %s158
      %p169 = scmp.eq.s32.totalorder %s23, 0
      %p170 = por %p168, %p169
      %p171 = scmp.ne.s32.totalorder %s157, %s158
      %p172 = scmp.eq.s32.totalorder %s24, 1
      %p173 = por %p171, %p172
      %p175 = scmp.ne.s32.totalorder %s158, %s174
      %p176 = scmp.eq.s32.totalorder %s24, 0
      %p177 = por %p175, %p176
      %p178 = scmp.le.s32.totalorder 1, %s18
      %p179 = scmp.lt.s32.totalorder %s18, 3
      %p180 = pnand %p178, %p179
      %p181 = pneg %p180
      // Predicated region
      $region9: #{tpu_custom_call.1} parent=5 // pred_check
        _
      $region10: #{tpu_custom_call.1} parent=5 // pred_check_branch
        %183 = sbr.rel (%p180) target = $region12
      $region11: #{tpu_custom_call.1} parent=5 // pred_region
        %s184 = ssub.s32 %s18, 1
        // Predicated region
        $region13: #{tpu_custom_call.1} parent=11 // pred_check
          %p185 = pneg %p79
        $region14: #{tpu_custom_call.1} parent=11 // pred_check_branch
          %187 = sbr.rel (%p185) target = $region16
        $region15: #{tpu_custom_call.1} parent=11 // pred_region
          %189 = vsyncadd [#allocation6], 0
          %s190 = sshll.u32 %s1, 4
          %s191 = int_to_ptr.hbm [resolvable:$true] %s190
          %s192 = sshll.u32 [#allocation5], 4
          %s193 = int_to_ptr.vmem [resolvable:$true] %s192
          %198 = dma.hbm_to_vmem [thread:$0]  %s191, 1024, %s193, [#allocation6], 64, 64, 4
        $region16: #{tpu_custom_call.1} parent=11 // pred_fallthru
          _
        // Predicated region
        $region17: #{tpu_custom_call.1} parent=11 // pred_check
          %p199 = pneg %p100
        $region18: #{tpu_custom_call.1} parent=11 // pred_check_branch
          %201 = sbr.rel (%p199) target = $region20
        $region19: #{tpu_custom_call.1} parent=11 // pred_region
          _
        $region20: #{tpu_custom_call.1} parent=11 // pred_fallthru
          _
        // Predicated region
        $region21: #{tpu_custom_call.1} parent=11 // pred_check
          %p202 = pneg %p121
        $region22: #{tpu_custom_call.1} parent=11 // pred_check_branch
          %204 = sbr.rel (%p202) target = $region24
        $region23: #{tpu_custom_call.1} parent=11 // pred_region
          %206 = vsyncadd [#allocation6], 0
          %s207 = sshll.u32 %s3, 4
          %s208 = int_to_ptr.hbm [resolvable:$true] %s207
          %s209 = sshll.u32 [#allocation7], 4
          %s210 = int_to_ptr.vmem [resolvable:$true] %s209
          %215 = dma.hbm_to_vmem [thread:$0]  %s208, 1024, %s210, [#allocation6], 64, 64, 4
        $region24: #{tpu_custom_call.1} parent=11 // pred_fallthru
          _
        // Predicated region
        $region25: #{tpu_custom_call.1} parent=11 // pred_check
          %p216 = pneg %p142
        $region26: #{tpu_custom_call.1} parent=11 // pred_check_branch
          %218 = sbr.rel (%p216) target = $region28
        $region27: #{tpu_custom_call.1} parent=11 // pred_region
          _
        $region28: #{tpu_custom_call.1} parent=11 // pred_fallthru
          _
      $region12: #{tpu_custom_call.1} parent=5 // pred_fallthru
        _
      %p219 = scmp.lt.s32.totalorder %s18, 2
      // Predicated region
      $region29: #{tpu_custom_call.1} parent=5 // pred_check
        %p220 = pneg %p219
      $region30: #{tpu_custom_call.1} parent=5 // pred_check_branch
        %222 = sbr.rel (%p220) target = $region32
      $region31: #{tpu_custom_call.1} parent=5 // pred_region
        // Predicated region
        $region33: #{tpu_custom_call.1} parent=31 // pred_check
          %p223 = pneg %p52
        $region34: #{tpu_custom_call.1} parent=31 // pred_check_branch
          %225 = sbr.rel (%p223) target = $region36
        $region35: #{tpu_custom_call.1} parent=31 // pred_region
          %s226 = sand.u32 %s42, 1
          %s227 = scalar_lea.sflag [#allocation3], %s226
          %s228 = sand.u32 %s42, 1
          %s229 = smul.addr %s228, 32
          %s230 = scalar_lea.vmem [#allocation2], %s229
          %232 = vsyncadd %s227, 0
          %s233 = smul.addr %s25, 8
          %s234 = sadd.s32 %s26, %s233
          %s235 = smul.addr %s234, 4
          %s236 = scalar_lea.hbm %s0, %s235
          %s237 = sshll.u32 %s236, 4
          %s238 = int_to_ptr.hbm [resolvable:$true] %s237
          %s239 = sshll.u32 %s230, 4
          %s240 = int_to_ptr.vmem [resolvable:$true] %s239
          %245 = dma.hbm_to_vmem [thread:$0]  %s238, 512, %s240, %s227, 64, 64, 4
        $region36: #{tpu_custom_call.1} parent=31 // pred_fallthru
          _
      $region32: #{tpu_custom_call.1} parent=5 // pred_fallthru
        _
      %p246 = scmp.le.s32.totalorder 1, %s18
      %p247 = scmp.lt.s32.totalorder %s18, 3
      %p248 = pnand %p246, %p247
      %p249 = pneg %p248
      // Predicated region
      $region37: #{tpu_custom_call.1} parent=5 // pred_check
        _
      $region38: #{tpu_custom_call.1} parent=5 // pred_check_branch
        %251 = sbr.rel (%p248) target = $region40
      $region39: #{tpu_custom_call.1} parent=5 // pred_region
        %s252 = ssub.s32 %s18, 1
        %s253 = sand.u32 %s45, 1
        %s254 = scalar_lea.sflag [#allocation3], %s253
        %s255 = sand.u32 %s45, 1
        %s256 = smul.addr %s255, 32
        %s257 = scalar_lea.vmem [#allocation2], %s256
        // Predicated region
        $region41: #{tpu_custom_call.1} parent=39 // pred_check
          %p258 = pneg %p58
        $region42: #{tpu_custom_call.1} parent=39 // pred_check_branch
          %260 = sbr.rel (%p258) target = $region44
        $region43: #{tpu_custom_call.1} parent=39 // pred_region
          %262 = dma.done %s254, 512
        $region44: #{tpu_custom_call.1} parent=39 // pred_fallthru
          _
        // Predicated region
        $region45: #{tpu_custom_call.1} parent=39 // pred_check
          %p263 = pneg %p79
        $region46: #{tpu_custom_call.1} parent=39 // pred_check_branch
          %265 = sbr.rel (%p263) target = $region48
        $region47: #{tpu_custom_call.1} parent=39 // pred_region
          %267 = dma.done [#allocation6], 1024
        $region48: #{tpu_custom_call.1} parent=39 // pred_fallthru
          _
        // Predicated region
        $region49: #{tpu_custom_call.1} parent=39 // pred_check
          %p268 = pneg %p121
        $region50: #{tpu_custom_call.1} parent=39 // pred_check_branch
          %270 = sbr.rel (%p268) target = $region52
        $region51: #{tpu_custom_call.1} parent=39 // pred_region
          %272 = dma.done [#allocation6], 1024
        $region52: #{tpu_custom_call.1} parent=39 // pred_fallthru
          _
        %s273 = sand.u32 %s45, 1
        %s274 = scalar_lea.sflag [#allocation3], %s273
        %s275 = sand.u32 %s45, 1
        %s276 = smul.addr %s275, 32
        %s277 = scalar_lea.vmem [#allocation2], %s276
        %p278 = pneg %p58
        %p279 = pneg %p55
        %p280 = pneg %p79
        %p281 = pneg %p76
        %p282 = pneg %p100
        %p283 = pneg %p97
        %p284 = pneg %p121
        %p285 = pneg %p118
        %p286 = pneg %p142
        %p287 = pneg %p139
        %p288 = pneg %p170
        %p289 = pneg %p167
        %s290 = sand.u32 %s157, 1
        %s291 = scalar_lea.sflag [#allocation4], %s290
        %s292 = sand.u32 %s157, 1
        %s293 = smul.addr %s292, 8
        %s294 = scalar_lea.vmem [#allocation8], %s293
        %v295 = vld [vmem:[%s257] sm:$0xf]
        %v296 = vld [vmem:[%s257 + $0x4] sm:$0xf]
        %v297 = vld [vmem:[%s257 + $0x8] sm:$0xf]
        %v298 = vld [vmem:[%s257 + $0xc] sm:$0xf]
        %v299 = vld [vmem:[%s257 + $0x10] sm:$0xf]
        %v300 = vld [vmem:[%s257 + $0x14] sm:$0xf]
        %v301 = vld [vmem:[%s257 + $0x18] sm:$0xf]
        %v302 = vld [vmem:[%s257 + $0x1c] sm:$0xf]
        %v303 = vld [vmem:[#allocation5] sm:$0xf]
        %v304 = vld [vmem:[#allocation5 + $0x4] sm:$0xf]
        %v305 = vld [vmem:[#allocation5 + $0x8] sm:$0xf]
        %v306 = vld [vmem:[#allocation5 + $0xc] sm:$0xf]
        %v307 = vld [vmem:[#allocation5 + $0x10] sm:$0xf]
        %v308 = vld [vmem:[#allocation5 + $0x14] sm:$0xf]
        %v309 = vld [vmem:[#allocation5 + $0x18] sm:$0xf]
        %v310 = vld [vmem:[#allocation5 + $0x1c] sm:$0xf]
        %v311 = vld [vmem:[#allocation5 + $0x20] sm:$0xf]
        %v312 = vld [vmem:[#allocation5 + $0x24] sm:$0xf]
        %v313 = vld [vmem:[#allocation5 + $0x28] sm:$0xf]
        %v314 = vld [vmem:[#allocation5 + $0x2c] sm:$0xf]
        %v315 = vld [vmem:[#allocation5 + $0x30] sm:$0xf]
        %v316 = vld [vmem:[#allocation5 + $0x34] sm:$0xf]
        %v317 = vld [vmem:[#allocation5 + $0x38] sm:$0xf]
        %v318 = vld [vmem:[#allocation5 + $0x3c] sm:$0xf]
        %v319 = vld [vmem:[%s2] sm:$0x1]
        %v321 = vperm.slane %v319, 0
        %v331 = vunpack.c.l.b16 %v295
        %v332 = vunpack.c.l.b16 %v296
        %v333 = vunpack.c.l.b16 %v297
        %v334 = vunpack.c.l.b16 %v298
        %v335 = vunpack.c.l.b16 %v299
        %v336 = vunpack.c.l.b16 %v300
        %v337 = vunpack.c.l.b16 %v301
        %v338 = vunpack.c.l.b16 %v302
        %v339 = vpack.c.b16 %v332, %v331
        %v340 = vpack.c.b16 %v334, %v333
        %v341 = vpack.c.b16 %v336, %v335
        %v342 = vpack.c.b16 %v338, %v337
        %v363 = vunpack.c.l.b16 %v303
        %v364 = vunpack.c.l.b16 %v304
        %v365 = vunpack.c.l.b16 %v305
        %v366 = vunpack.c.l.b16 %v306
        %v367 = vunpack.c.l.b16 %v307
        %v368 = vunpack.c.l.b16 %v308
        %v369 = vunpack.c.l.b16 %v309
        %v370 = vunpack.c.l.b16 %v310
        %v371 = vunpack.c.l.b16 %v311
        %v372 = vunpack.c.l.b16 %v312
        %v373 = vunpack.c.l.b16 %v313
        %v374 = vunpack.c.l.b16 %v314
        %v375 = vunpack.c.l.b16 %v315
        %v376 = vunpack.c.l.b16 %v316
        %v377 = vunpack.c.l.b16 %v317
        %v378 = vunpack.c.l.b16 %v318
        %v379 = vpack.c.b16 %v364, %v363
        %v380 = vpack.c.b16 %v366, %v365
        %v381 = vpack.c.b16 %v368, %v367
        %v382 = vpack.c.b16 %v370, %v369
        %v383 = vpack.c.b16 %v372, %v371
        %v384 = vpack.c.b16 %v374, %v373
        %v385 = vpack.c.b16 %v376, %v375
        %v386 = vpack.c.b16 %v378, %v377
        %395 = vmatpush.bf16.msra.mxu0 %v386
        %396 = vmatpush.bf16.msra.mxu0 %v385
        %397 = vmatpush.bf16.msra.mxu0 %v384
        %398 = vmatpush.bf16.msra.mxu0 %v383
        %399 = vmatpush.bf16.msra.mxu0 %v382
        %400 = vmatpush.bf16.msra.mxu0 %v381
        %401 = vmatpush.bf16.msra.mxu0 %v380
        %402 = vmatpush.bf16.msra.mxu0 %v379
        %403 = vmatmul.bf16.gmra.mxu0 %v339
        %v404 = vpop.f32.mrf.mxu0
        %v405 = vadd.f32 %v321, %v404
        %v406 = vpop.f32.mrf.mxu0
        %v407 = vadd.f32 %v321, %v406
        %408 = vmatmul.bf16.gmra.mxu0 %v340
        %v409 = vpop.f32.mrf.mxu0
        %v410 = vadd.f32 %v321, %v409
        %v411 = vpop.f32.mrf.mxu0
        %v412 = vadd.f32 %v321, %v411
        %413 = vmatmul.bf16.gmra.mxu0 %v341
        %v414 = vpop.f32.mrf.mxu0
        %v415 = vadd.f32 %v321, %v414
        %v416 = vpop.f32.mrf.mxu0
        %v417 = vadd.f32 %v321, %v416
        %418 = vmatmul.bf16.gmra.mxu0 %v342
        %v419 = vpop.f32.mrf.mxu0
        %v420 = vadd.f32 %v321, %v419
        %v421 = vpop.f32.mrf.mxu0
        %v422 = vadd.f32 %v321, %v421
        %423 = vdwg.mxu0
        %v424 = vmax.f32 %v405, 0.0
        %v425 = vmax.f32 %v407, 0.0
        %v426 = vmax.f32 %v410, 0.0
        %v427 = vmax.f32 %v412, 0.0
        %v428 = vmax.f32 %v415, 0.0
        %v429 = vmax.f32 %v417, 0.0
        %v430 = vmax.f32 %v420, 0.0
        %v431 = vmax.f32 %v422, 0.0
        %v432 = vpack.c.bf16 %v425, %v424
        %v433 = vpack.c.bf16 %v427, %v426
        %v434 = vpack.c.bf16 %v429, %v428
        %v435 = vpack.c.bf16 %v431, %v430
        %v436 = vld [vmem:[#allocation7] sm:$0xf]
        %v437 = vld [vmem:[#allocation7 + $0x4] sm:$0xf]
        %v438 = vld [vmem:[#allocation7 + $0x8] sm:$0xf]
        %v439 = vld [vmem:[#allocation7 + $0xc] sm:$0xf]
        %v440 = vld [vmem:[#allocation7 + $0x10] sm:$0xf]
        %v441 = vld [vmem:[#allocation7 + $0x14] sm:$0xf]
        %v442 = vld [vmem:[#allocation7 + $0x18] sm:$0xf]
        %v443 = vld [vmem:[#allocation7 + $0x1c] sm:$0xf]
        %v444 = vld [vmem:[#allocation7 + $0x20] sm:$0xf]
        %v445 = vld [vmem:[#allocation7 + $0x24] sm:$0xf]
        %v446 = vld [vmem:[#allocation7 + $0x28] sm:$0xf]
        %v447 = vld [vmem:[#allocation7 + $0x2c] sm:$0xf]
        %v448 = vld [vmem:[#allocation7 + $0x30] sm:$0xf]
        %v449 = vld [vmem:[#allocation7 + $0x34] sm:$0xf]
        %v450 = vld [vmem:[#allocation7 + $0x38] sm:$0xf]
        %v451 = vld [vmem:[#allocation7 + $0x3c] sm:$0xf]
        %v452 = vld [vmem:[%s4] sm:$0x1]
        %v454 = vperm.slane %v452, 0
        %v472 = vunpack.c.l.b16 %v436
        %v473 = vunpack.c.l.b16 %v437
        %v474 = vunpack.c.l.b16 %v438
        %v475 = vunpack.c.l.b16 %v439
        %v476 = vunpack.c.l.b16 %v440
        %v477 = vunpack.c.l.b16 %v441
        %v478 = vunpack.c.l.b16 %v442
        %v479 = vunpack.c.l.b16 %v443
        %v480 = vunpack.c.l.b16 %v444
        %v481 = vunpack.c.l.b16 %v445
        %v482 = vunpack.c.l.b16 %v446
        %v483 = vunpack.c.l.b16 %v447
        %v484 = vunpack.c.l.b16 %v448
        %v485 = vunpack.c.l.b16 %v449
        %v486 = vunpack.c.l.b16 %v450
        %v487 = vunpack.c.l.b16 %v451
        %v488 = vpack.c.b16 %v473, %v472
        %v489 = vpack.c.b16 %v475, %v474
        %v490 = vpack.c.b16 %v477, %v476
        %v491 = vpack.c.b16 %v479, %v478
        %v492 = vpack.c.b16 %v481, %v480
        %v493 = vpack.c.b16 %v483, %v482
        %v494 = vpack.c.b16 %v485, %v484
        %v495 = vpack.c.b16 %v487, %v486
        %504 = vmatpush.bf16.msra.mxu0 %v495
        %505 = vmatpush.bf16.msra.mxu0 %v494
        %506 = vmatpush.bf16.msra.mxu0 %v493
        %507 = vmatpush.bf16.msra.mxu0 %v492
        %508 = vmatpush.bf16.msra.mxu0 %v491
        %509 = vmatpush.bf16.msra.mxu0 %v490
        %510 = vmatpush.bf16.msra.mxu0 %v489
        %511 = vmatpush.bf16.msra.mxu0 %v488
        %512 = vmatmul.bf16.gmra.mxu0 %v432
        %v513 = vpop.f32.mrf.mxu0
        %v514 = vadd.f32 %v454, %v513
        %v515 = vpop.f32.mrf.mxu0
        %v516 = vadd.f32 %v454, %v515
        %517 = vmatmul.bf16.gmra.mxu0 %v433
        %v518 = vpop.f32.mrf.mxu0
        %v519 = vadd.f32 %v454, %v518
        %v520 = vpop.f32.mrf.mxu0
        %v521 = vadd.f32 %v454, %v520
        %522 = vmatmul.bf16.gmra.mxu0 %v434
        %v523 = vpop.f32.mrf.mxu0
        %v524 = vadd.f32 %v454, %v523
        %v525 = vpop.f32.mrf.mxu0
        %v526 = vadd.f32 %v454, %v525
        %527 = vmatmul.bf16.gmra.mxu0 %v435
        %v528 = vpop.f32.mrf.mxu0
        %v529 = vadd.f32 %v454, %v528
        %v530 = vpop.f32.mrf.mxu0
        %v531 = vadd.f32 %v454, %v530
        %532 = vdwg.mxu0
        %v533 = vmax.f32 %v514, 0.0
        %v534 = vmax.f32 %v516, 0.0
        %v535 = vmax.f32 %v519, 0.0
        %v536 = vmax.f32 %v521, 0.0
        %v537 = vmax.f32 %v524, 0.0
        %v538 = vmax.f32 %v526, 0.0
        %v539 = vmax.f32 %v529, 0.0
        %v540 = vmax.f32 %v531, 0.0
        %v541 = vmax.f32 %v533, %v534
        %v542 = vmax.f32 %v541, %v535
        %v543 = vmax.f32 %v542, %v536
        %v544 = vmax.f32 %v543, %v537
        %v545 = vmax.f32 %v544, %v538
        %v546 = vmax.f32 %v545, %v539
        %v547 = vmax.f32 %v546, %v540
        %548 = vst [vmem:[%s294] sm:$0xff] %v547
        %s549 = sand.u32 %s157, 1
        %s550 = scalar_lea.sflag [#allocation4], %s549
        %s551 = sand.u32 %s157, 1
        %s552 = smul.addr %s551, 8
        %s553 = scalar_lea.vmem [#allocation8], %s552
        // Predicated region
        $region53: #{tpu_custom_call.1} parent=39 // pred_check
          %p554 = pneg %p167
        $region54: #{tpu_custom_call.1} parent=39 // pred_check_branch
          %556 = sbr.rel (%p554) target = $region56
        $region55: #{tpu_custom_call.1} parent=39 // pred_region
          %558 = vsyncadd %s550, 0
          %s559 = sadd.s32 %s28, %s27
          %s560 = smul.addr %s559, 8
          %s561 = scalar_lea.hbm %s5, %s560
          %s563 = sshll.u32 %s553, 4
          %s564 = int_to_ptr.vmem [resolvable:$true] %s563
          %s565 = sshll.u32 %s561, 4
          %s566 = int_to_ptr.hbm [resolvable:$true] %s565
          %568 = dma.vmem_to_hbm [thread:$0]  %s564, 128, %s566, %s550
        $region56: #{tpu_custom_call.1} parent=39 // pred_fallthru
          _
      $region40: #{tpu_custom_call.1} parent=5 // pred_fallthru
        _
      %p569 = scmp.le.s32.totalorder 2, %s18
      // Predicated region
      $region57: #{tpu_custom_call.1} parent=5 // pred_check
        %p570 = pneg %p569
      $region58: #{tpu_custom_call.1} parent=5 // pred_check_branch
        %572 = sbr.rel (%p570) target = $region60
      $region59: #{tpu_custom_call.1} parent=5 // pred_region
        %s573 = ssub.s32 %s18, 2
        // Predicated region
        $region61: #{tpu_custom_call.1} parent=59 // pred_check
          %p574 = pneg %p173
        $region62: #{tpu_custom_call.1} parent=59 // pred_check_branch
          %576 = sbr.rel (%p574) target = $region64
        $region63: #{tpu_custom_call.1} parent=59 // pred_region
          %s577 = sand.u32 %s158, 1
          %s578 = scalar_lea.sflag [#allocation4], %s577
          %s579 = sand.u32 %s158, 1
          %s580 = smul.addr %s579, 8
          %s581 = scalar_lea.vmem [#allocation8], %s580
          %583 = dma.done %s578, 128
        $region64: #{tpu_custom_call.1} parent=59 // pred_fallthru
          _
      $region60: #{tpu_custom_call.1} parent=5 // pred_fallthru
        _
    $region6: #{tpu_custom_call.1} parent=1 // loop_footer
      %s22 = sadd.s32 1, %s18
    $region7: #{tpu_custom_call.1} parent=1 // loop_footer_branch
      %17 = sbr.rel target = $region3
    $region8: #{tpu_custom_call.1} parent=1 // loop_exit
      _
    %584 = vsyncpa [#allocation3], 1
    %s585 = scalar_lea.sflag [#allocation3], 1
    %586 = vsyncpa %s585, 1
    %587 = vsyncpa [#allocation6], 1
    %588 = vsyncpa [#allocation4], 1
    %s589 = scalar_lea.sflag [#allocation4], 1
    %590 = vsyncpa %s589, 1

</llo_original>
